<compile_context>
chip_gen: v7x
topology: tpu7x:2x2x1
jax: 0.10.0
libtpu: 0.0.40
codegen_flags: <defaults>
</compile_context>

<pallas_src>
import jax
import jax.numpy as jnp
from jax.experimental import pallas as pl
from jax.experimental.pallas import tpu as pltpu


NEG_SLOPE = 0.01  # torch.nn.functional.leaky_relu default


def _leaky_relu(x):
    return jnp.where(x > 0, x, NEG_SLOPE * x)


def _round_up(x, m):
    return ((x + m - 1) // m) * m


def _fold_factor(d_in, h0, h1, max_fold=32):
    """Smallest F so that F*d_in, F*h0, F*h1 are all multiples of 128 lanes."""
    for f in range(1, max_fold + 1):
        if (f * d_in) % 128 == 0 and (f * h0) % 128 == 0 and (f * h1) % 128 == 0:
            return f
    return 1


def _block_diag(w, f):
    """(din, dout) -> (f*din, f*dout) block-diagonal with f copies of w."""
    if f == 1:
        return w
    din, dout = w.shape
    eye = jnp.eye(f, dtype=w.dtype)
    return jnp.einsum("fg,ij->figj", eye, w).reshape(f * din, f * dout)


# ---------------------------------------------------------------------------
# Kernel: fused (x @ W0 + b0 -> leaky_relu) @ W1 + b1 -> leaky_relu
# ---------------------------------------------------------------------------
def encoder_kernel(x_ref, w0_ref, b0_ref, w1_ref, b1_ref, o_ref):
    # Layer 0 on the MXU, f32 accumulation; bias + activation in f32.
    h = jnp.dot(x_ref[...], w0_ref[...], preferred_element_type=jnp.float32)
    h = _leaky_relu(h + b0_ref[...].astype(jnp.float32))
    # Layer 1: keep the activations in f32 unless W1 was deliberately given in
    # a narrower dtype (perf review: avoid the lossy h downcast; W1 is tiny).
    lhs = h if w1_ref.dtype == jnp.float32 else h.astype(w1_ref.dtype)
    y = jnp.dot(lhs, w1_ref[...], preferred_element_type=jnp.float32)
    y = _leaky_relu(y + b1_ref[...].astype(jnp.float32))
    o_ref[...] = y.astype(o_ref.dtype)


def _mlp2_tiled(x, w0, b0, w1, b1, *, block_rows, vmem_limit_bytes):
    """Run the fused kernel over a 1-D batch-tiled 'parallel' grid."""
    n_rows, d_in = x.shape
    h0 = w0.shape[1]
    h1 = w1.shape[1]
    sublane = 16 if x.dtype == jnp.bfloat16 else 8

    bb = _round_up(max(block_rows, sublane), sublane)
    # v7x megacore: keep >=4 grid steps when the batch allows it (a no-op on
    # v5e/v6e), but never shrink tiles below 512 rows, which already
    # amortizes the ~0.35us per-step overhead.
    bb = min(bb, max(_round_up(pl.cdiv(n_rows, 4), sublane), 512))
    bb = min(bb, _round_up(n_rows, sublane))

    n_pad = _round_up(n_rows, bb)
    if n_pad != n_rows:
        x = jnp.pad(x, ((0, n_pad - n_rows), (0, 0)))
    grid = (n_pad // bb,)

    x_bytes = jnp.dtype(x.dtype).itemsize
    w_bytes = (d_in * h0 * jnp.dtype(w0.dtype).itemsize
               + h0 * h1 * jnp.dtype(w1.dtype).itemsize
               + (h0 + h1) * 4)
    if vmem_limit_bytes is None:
        # Double-buffered x/out tiles + f32 temporaries + resident weights,
        # with 2x headroom; capped at 48 MiB (v7x physical VMEM is 64 MiB).
        est = 2 * bb * (d_in + h1) * x_bytes + bb * (h0 + h1) * 4 + w_bytes
        vmem_limit_bytes = min(48 * 1024 * 1024, max(2 * est, 24 * 1024 * 1024))

    cost = pl.CostEstimate(
        flops=2 * n_pad * (d_in * h0 + h0 * h1),
        transcendentals=0,
        bytes_accessed=n_pad * (d_in + h1) * x_bytes + w_bytes,
    )

    out = pl.pallas_call(
        encoder_kernel,
        out_shape=jax.ShapeDtypeStruct((n_pad, h1), x.dtype),
        grid_spec=pltpu.PrefetchScalarGridSpec(
            num_scalar_prefetch=0,
            grid=grid,
            in_specs=[
                pl.BlockSpec((bb, d_in), lambda i: (i, 0)),   # x tile (pipelined)
                pl.BlockSpec((d_in, h0), lambda i: (0, 0)),   # W0' (VMEM-resident)
                pl.BlockSpec((1, h0), lambda i: (0, 0)),      # b0'
                pl.BlockSpec((h0, h1), lambda i: (0, 0)),     # W1' (VMEM-resident)
                pl.BlockSpec((1, h1), lambda i: (0, 0)),      # b1'
            ],
            out_specs=pl.BlockSpec((bb, h1), lambda i: (i, 0)),
        ),
        compiler_params=pltpu.CompilerParams(
            dimension_semantics=("parallel",),   # megacore batch sharding
            vmem_limit_bytes=vmem_limit_bytes,
        ),
        cost_estimate=cost,
    )(x, w0, b0, w1, b1)

    return out[:n_rows] if n_pad != n_rows else out


def _xla_forward(x, w0, b0, w1, b1):
    h = _leaky_relu(x @ w0 + b0)
    return _leaky_relu(h @ w1 + b1)


def encoder_forward(x, w0, b0, w1, b1, *, block_b=8192, bf16_io=False,
                    vmem_limit_bytes=None, min_pallas_batch=2048):
    """Fused forward of `Encoder` (the final Linear is unused by forward()).

    x : (B, input_dim)               activations
    w0: (input_dim, h0), b0: (1, h0) pre-transposed weight; bias f32
    w1: (h0, h1),        b1: (1, h1)

    block_b   : batch-tile size in ORIGINAL rows (default ~8192).
    bf16_io   : cast x/W0/output to bf16 (recommended on v6e/v7x and on
                bandwidth-bound v5e); accumulation, bias, activation and the
                second matmul stay in f32.
    Returns (B, h1).
    """
    B, d_in = x.shape
    h0 = w0.shape[1]
    h1 = w1.shape[1]

    # Tiny batches: pallas_call launch + one grid step dominate -> plain XLA.
    if B < min_pallas_batch:
        return _xla_forward(x, w0, b0, w1, b1)

    if bf16_io:
        x = x.astype(jnp.bfloat16)
        w0 = w0.astype(jnp.bfloat16)
        # W1 / biases deliberately stay f32 (tiny, and keeps h in f32).

    # Fold F batch rows into the 128-lane axis; expand weights block-diagonally.
    f = _fold_factor(d_in, h0, h1)
    b_pad = _round_up(B, f)
    if b_pad != B:
        x = jnp.pad(x, ((0, b_pad - B), (0, 0)))
    xf = x.reshape(b_pad // f, f * d_in)          # free: row-major reshape
    w0f = _block_diag(w0, f)
    b0f = jnp.tile(b0, (1, f))
    w1f = _block_diag(w1, f)
    b1f = jnp.tile(b1, (1, f))

    yf = _mlp2_tiled(xf, w0f, b0f, w1f, b1f,
                     block_rows=max(block_b // f, 1),
                     vmem_limit_bytes=vmem_limit_bytes)
    return yf.reshape(b_pad, h1)[:B]


# ---------------------------------------------------------------------------
# Parameter init / reference
# ---------------------------------------------------------------------------
def init_linear_params(key, in_features, out_features, dtype=jnp.float32):
    """nn.Linear-style U(-1/sqrt(fan_in), 1/sqrt(fan_in)); weight returned
    pre-transposed as (in_features, out_features), bias as (1, out_features)."""
    kw, kb = jax.random.split(key)
    bound = 1.0 / jnp.sqrt(jnp.asarray(in_features, dtype))
    w = jax.random.uniform(kw, (in_features, out_features), dtype, -bound, bound)
    b = jax.random.uniform(kb, (1, out_features), dtype, -bound, bound)
    return w, b


def reference_forward(x, w0, b0, w1, b1):
    h = x @ w0 + b0
    h = jnp.where(h > 0, h, NEG_SLOPE * h)
    y = h @ w1 + b1
    return jnp.where(y > 0, y, NEG_SLOPE * y)


if __name__ == "__main__":
    # Shapes consistent with the module: batch=8, input_dim=32,
    # hidden_dim=[64, 32], output_dim=16 (final Linear unused in forward).
    batch, input_dim = 8, 32
    hidden_dim = [64, 32]
    output_dim = 16

    key = jax.random.PRNGKey(0)
    kx, k0, k1, k2 = jax.random.split(key, 4)

    x = jax.random.normal(kx, (batch, input_dim), jnp.float32)
    w0, b0 = init_linear_params(k0, input_dim, hidden_dim[0])
    w1, b1 = init_linear_params(k1, hidden_dim[0], hidden_dim[1])
    # Mirrors __init__ only; forward never applies this layer.
    w2, b2 = init_linear_params(k2, hidden_dim[1], output_dim)

    ref = reference_forward(x, w0, b0, w1, b1)

    # 1) f32 Pallas path (force past the small-batch XLA dispatch).
    out = jax.block_until_ready(
        encoder_forward(x, w0, b0, w1, b1, min_pallas_batch=0))
    assert out.shape == (batch, hidden_dim[1]), out.shape
    assert jnp.allclose(out, ref, atol=1e-5, rtol=1e-5), "f32 mismatch"

    # 2) Ragged batch: 301 rows -> fold-pad to 304, 5 pipelined grid steps.
    xb = jax.random.normal(kx, (301, input_dim), jnp.float32)
    refb = reference_forward(xb, w0, b0, w1, b1)
    outb = jax.block_until_ready(
        encoder_forward(xb, w0, b0, w1, b1, block_b=64, min_pallas_batch=0))
    assert outb.shape == (301, hidden_dim[1]), outb.shape
    assert jnp.allclose(outb, refb, atol=1e-5, rtol=1e-5), "ragged mismatch"

    # 3) bf16 I/O path (halves x/y HBM traffic; h and W1 stay f32 in-kernel).
    out_bf = jax.block_until_ready(
        encoder_forward(x, w0, b0, w1, b1, bf16_io=True, min_pallas_batch=0))
    assert out_bf.shape == (batch, hidden_dim[1]), out_bf.shape
    assert jnp.allclose(out_bf.astype(jnp.float32), ref, atol=2e-2, rtol=5e-2), \
        "bf16 path diverged"

    # 4) Small-batch dispatch (default min_pallas_batch) falls back to XLA.
    out_small = jax.block_until_ready(encoder_forward(x, w0, b0, w1, b1))
    assert jnp.allclose(out_small, ref, atol=1e-6, rtol=1e-6), "fallback mismatch"

    print("KERNEL_OK")
</pallas_src>

<mosaic_0001>
module attributes {stable_mosaic.version = 11 : i64} {
  func.func @encoder_kernel(%arg0: i32, %arg1: memref<8x128xf32, #tpu.memory_space<vmem>>, %arg2: memref<128x256xf32, #tpu.memory_space<vmem>>, %arg3: memref<1x256xf32, #tpu.memory_space<vmem>>, %arg4: memref<256x128xf32, #tpu.memory_space<vmem>>, %arg5: memref<1x128xf32, #tpu.memory_space<vmem>>, %arg6: memref<8x128xf32, #tpu.memory_space<vmem>>) attributes {dimension_semantics = [#tpu.dimension_semantics<parallel>], iteration_bounds = array<i64: 1>, scalar_prefetch = 0 : i64, scratch_operands = 0 : i64, tpu.core_type = #tpu.core_type<tc>, window_params = [{transform_indices = @transform_0, window_bounds = array<i64: 8, 128>}, {pipeline_mode = #tpu.pipeline_mode<synchronous>, transform_indices = @transform_1, window_bounds = array<i64: 128, 256>}, {pipeline_mode = #tpu.pipeline_mode<synchronous>, transform_indices = @transform_2, window_bounds = array<i64: 1, 256>}, {pipeline_mode = #tpu.pipeline_mode<synchronous>, transform_indices = @transform_3, window_bounds = array<i64: 256, 128>}, {pipeline_mode = #tpu.pipeline_mode<synchronous>, transform_indices = @transform_4, window_bounds = array<i64: 1, 128>}, {transform_indices = @transform_5, window_bounds = array<i64: 8, 128>}]} {
    %c0 = arith.constant 0 : index
    %c0_0 = arith.constant 0 : index
    %0 = vector.load %arg1[%c0, %c0_0] : memref<8x128xf32, #tpu.memory_space<vmem>>, vector<8x128xf32>
    %c0_1 = arith.constant 0 : index
    %c0_2 = arith.constant 0 : index
    %1 = vector.load %arg2[%c0_1, %c0_2] : memref<128x256xf32, #tpu.memory_space<vmem>>, vector<128x256xf32>
    %cst = arith.constant dense<0.000000e+00> : vector<8x256xf32>
    %2 = tpu.matmul %0, %1, %cst {dimension_numbers = #tpu.dot_dimension_numbers<[1], [0], [0], [1], [0, 0, 1, 1], [], []>} : vector<8x128xf32>, vector<128x256xf32>, vector<8x256xf32> -> vector<8x256xf32>
    %c0_3 = arith.constant 0 : index
    %c0_4 = arith.constant 0 : index
    %3 = vector.load %arg3[%c0_3, %c0_4] : memref<1x256xf32, #tpu.memory_space<vmem>>, vector<1x256xf32>
    %4 = vector.broadcast %3 : vector<1x256xf32> to vector<8x256xf32>
    %5 = arith.addf %2, %4 : vector<8x256xf32>
    %cst_5 = arith.constant 0.000000e+00 : f32
    %6 = vector.broadcast %cst_5 : f32 to vector<8x256xf32>
    %7 = arith.cmpf ogt, %5, %6 : vector<8x256xf32>
    %cst_6 = arith.constant 0.00999999977 : f32
    %8 = vector.broadcast %cst_6 : f32 to vector<8x256xf32>
    %9 = arith.mulf %8, %5 : vector<8x256xf32>
    %10 = arith.select %7, %5, %9 : vector<8x256xi1>, vector<8x256xf32>
    %c0_7 = arith.constant 0 : index
    %c0_8 = arith.constant 0 : index
    %11 = vector.load %arg4[%c0_7, %c0_8] : memref<256x128xf32, #tpu.memory_space<vmem>>, vector<256x128xf32>
    %cst_9 = arith.constant dense<0.000000e+00> : vector<8x128xf32>
    %12 = tpu.matmul %10, %11, %cst_9 {dimension_numbers = #tpu.dot_dimension_numbers<[1], [0], [0], [1], [0, 0, 1, 1], [], []>} : vector<8x256xf32>, vector<256x128xf32>, vector<8x128xf32> -> vector<8x128xf32>
    %c0_10 = arith.constant 0 : index
    %c0_11 = arith.constant 0 : index
    %13 = vector.load %arg5[%c0_10, %c0_11] : memref<1x128xf32, #tpu.memory_space<vmem>>, vector<1x128xf32>
    %14 = vector.broadcast %13 : vector<1x128xf32> to vector<8x128xf32>
    %15 = arith.addf %12, %14 : vector<8x128xf32>
    %cst_12 = arith.constant 0.000000e+00 : f32
    %16 = vector.broadcast %cst_12 : f32 to vector<8x128xf32>
    %17 = arith.cmpf ogt, %15, %16 : vector<8x128xf32>
    %cst_13 = arith.constant 0.00999999977 : f32
    %18 = vector.broadcast %cst_13 : f32 to vector<8x128xf32>
    %19 = arith.mulf %18, %15 : vector<8x128xf32>
    %20 = arith.select %17, %15, %19 : vector<8x128xi1>, vector<8x128xf32>
    %c0_14 = arith.constant 0 : index
    %c0_15 = arith.constant 0 : index
    %21 = vector.load %arg6[%c0_14, %c0_15] : memref<8x128xf32, #tpu.memory_space<vmem>>, vector<8x128xf32>
    tpu.vector_store %arg6[%c0_14, %c0_15], %20 {strides = array<i32>} : memref<8x128xf32, #tpu.memory_space<vmem>>, vector<8x128xf32>,
    return
  }
  func.func @transform_0(%arg0: i32) -> (i32, i32) {
    %c0_i32 = arith.constant 0 : i32
    %c0_i32_0 = arith.constant 0 : i32
    return %arg0, %c0_i32 : i32, i32
  }
  func.func @transform_1(%arg0: i32) -> (i32, i32) {
    %c0_i32 = arith.constant 0 : i32
    %c0_i32_0 = arith.constant 0 : i32
    %c0_i32_1 = arith.constant 0 : i32
    return %c0_i32, %c0_i32_0 : i32, i32
  }
  func.func @transform_2(%arg0: i32) -> (i32, i32) {
    %c0_i32 = arith.constant 0 : i32
    %c0_i32_0 = arith.constant 0 : i32
    %c0_i32_1 = arith.constant 0 : i32
    return %c0_i32, %c0_i32_0 : i32, i32
  }
  func.func @transform_3(%arg0: i32) -> (i32, i32) {
    %c0_i32 = arith.constant 0 : i32
    %c0_i32_0 = arith.constant 0 : i32
    %c0_i32_1 = arith.constant 0 : i32
    return %c0_i32, %c0_i32_0 : i32, i32
  }
  func.func @transform_4(%arg0: i32) -> (i32, i32) {
    %c0_i32 = arith.constant 0 : i32
    %c0_i32_0 = arith.constant 0 : i32
    %c0_i32_1 = arith.constant 0 : i32
    return %c0_i32, %c0_i32_0 : i32, i32
  }
  func.func @transform_5(%arg0: i32) -> (i32, i32) {
    %c0_i32 = arith.constant 0 : i32
    %c0_i32_0 = arith.constant 0 : i32
    return %arg0, %c0_i32 : i32, i32
  }
}

</mosaic_0001>

<llo_original>
// kernel: tpu_custom_call.1
$region0: #{tpu_custom_call.1}
  #allocation0 [shape = 'u32[]', space=smem, size = 0x4, offset = 0x4, fixed_abs, tag = 'smem constant byte address 0x4 - core index']
  #allocation1 [shape = 'u32[144,128]{1,0:T(1,128)}', space=vmem, size = 0x12000, scoped, tag = 'internal scratch']
  %s0 = inlined_call_operand.hbm [shape: f32[8,128], index: 0, kind: input, shape index: {}]
  %s1 = inlined_call_operand.hbm [shape: f32[128,256], index: 1, kind: input, shape index: {}]
  %s2 = inlined_call_operand.vmem [shape: f32[1,256], index: 2, kind: input, shape index: {}]
  %s3 = inlined_call_operand.hbm [shape: f32[256,128], index: 3, kind: input, shape index: {}]
  %s4 = inlined_call_operand.vmem [shape: f32[1,128], index: 4, kind: input, shape index: {}]
  %s5 = inlined_call_operand.hbm [shape: f32[8,128], index: 5, kind: output, shape index: {}]
  %s6 = sld [smem:[#allocation0]]
  $region42: #{tpu_custom_call.1} parent=0
    _
  %s8 = ssub.s32 1, %s6
  %s9 = scalar_select 0, %s8, %s6
  $region1: #{tpu_custom_call.1} parent=0
    #allocation2 [shape = 'u8[4096]{0}', space=vmem, size = 0x1000, scoped, tag = 'input window, operand 0, single buffered']
    #allocation3 [shape = 's32[1]{0}', space=sflag, size = 0x4, scoped, tag = 'scoped memory for tpu_custom_call.1']
    #allocation4 [shape = 's32[1]{0}', space=sflag, size = 0x4, scoped, tag = 'scoped memory for tpu_custom_call.1']
    #allocation5 [shape = 'u8[131072]{0}', space=vmem, size = 0x20000, scoped, tag = 'input window, operand 1, single buffered']
    #allocation6 [shape = 's32[1]{0}', space=sflag, size = 0x4, scoped, tag = 'scoped memory for tpu_custom_call.1']
    #allocation7 [shape = 'u8[131072]{0}', space=vmem, size = 0x20000, scoped, tag = 'input window, operand 3, single buffered']
    #allocation8 [shape = 'u8[4096]{0}', space=vmem, size = 0x1000, scoped, tag = 'output window, operand 0, single buffered']
    %10 = vsyncpa [#allocation3], 0
    %11 = vsyncpa [#allocation6], 0
    %12 = vsyncpa [#allocation4], 0
    // Predicated region
    $region2: #{tpu_custom_call.1} parent=1 // pred_check
      _
    $region3: #{tpu_custom_call.1} parent=1 // pred_check_branch
      %14 = sbr.rel (0) target = $region5
    $region4: #{tpu_custom_call.1} parent=1 // pred_region
      %s16 = ssub.s32 128, 128
      %17 = vsyncadd [#allocation3], %s16
      %s19 = sshll.u32 [#allocation2], 4
      %s20 = int_to_ptr.vmem [resolvable:$true] %s19
      %22 = dma.hbm_to_vmem [thread:$0]  %s0, 128, %s20, [#allocation3]
    $region5: #{tpu_custom_call.1} parent=1 // pred_fallthru
      _
    // Predicated region
    $region6: #{tpu_custom_call.1} parent=1 // pred_check
      _
    $region7: #{tpu_custom_call.1} parent=1 // pred_check_branch
      %24 = sbr.rel (0) target = $region9
    $region8: #{tpu_custom_call.1} parent=1 // pred_region
      %s26 = ssub.s32 4096, 4096
      %27 = vsyncadd [#allocation6], %s26
      %s28 = sshll.u32 [#allocation5], 4
      %s29 = int_to_ptr.vmem [resolvable:$true] %s28
      %34 = dma.hbm_to_vmem [thread:$0]  %s1, 4096, %s29, [#allocation6], 256, 256, 16
    $region9: #{tpu_custom_call.1} parent=1 // pred_fallthru
      _
    // Predicated region
    $region10: #{tpu_custom_call.1} parent=1 // pred_check
      _
    $region11: #{tpu_custom_call.1} parent=1 // pred_check_branch
      %36 = sbr.rel (0) target = $region13
    $region12: #{tpu_custom_call.1} parent=1 // pred_region
      _
    $region13: #{tpu_custom_call.1} parent=1 // pred_fallthru
      _
    // Predicated region
    $region14: #{tpu_custom_call.1} parent=1 // pred_check
      _
    $region15: #{tpu_custom_call.1} parent=1 // pred_check_branch
      %38 = sbr.rel (0) target = $region17
    $region16: #{tpu_custom_call.1} parent=1 // pred_region
      %s40 = ssub.s32 4096, 4096
      %41 = vsyncadd [#allocation6], %s40
      %s42 = sshll.u32 [#allocation7], 4
      %s43 = int_to_ptr.vmem [resolvable:$true] %s42
      %48 = dma.hbm_to_vmem [thread:$0]  %s3, 4096, %s43, [#allocation6], 128, 128, 8
    $region17: #{tpu_custom_call.1} parent=1 // pred_fallthru
      _
    // Predicated region
    $region18: #{tpu_custom_call.1} parent=1 // pred_check
      _
    $region19: #{tpu_custom_call.1} parent=1 // pred_check_branch
      %50 = sbr.rel (0) target = $region21
    $region20: #{tpu_custom_call.1} parent=1 // pred_region
      _
    $region21: #{tpu_custom_call.1} parent=1 // pred_fallthru
      _
    // Predicated region
    $region22: #{tpu_custom_call.1} parent=1 // pred_check
      _
    $region23: #{tpu_custom_call.1} parent=1 // pred_check_branch
      %52 = sbr.rel (0) target = $region25
    $region24: #{tpu_custom_call.1} parent=1 // pred_region
      %53 = dma.done [#allocation3], 128
    $region25: #{tpu_custom_call.1} parent=1 // pred_fallthru
      _
    // Predicated region
    $region26: #{tpu_custom_call.1} parent=1 // pred_check
      _
    $region27: #{tpu_custom_call.1} parent=1 // pred_check_branch
      %55 = sbr.rel (0) target = $region29
    $region28: #{tpu_custom_call.1} parent=1 // pred_region
      %56 = dma.done [#allocation6], 4096
    $region29: #{tpu_custom_call.1} parent=1 // pred_fallthru
      _
    // Predicated region
    $region30: #{tpu_custom_call.1} parent=1 // pred_check
      _
    $region31: #{tpu_custom_call.1} parent=1 // pred_check_branch
      %58 = sbr.rel (0) target = $region33
    $region32: #{tpu_custom_call.1} parent=1 // pred_region
      %59 = dma.done [#allocation6], 4096
    $region33: #{tpu_custom_call.1} parent=1 // pred_fallthru
      _
    %v60 = vld [vmem:[#allocation2] sm:$0xff]
    %v61 = vld [vmem:[#allocation5] sm:$0xff]
    %v62 = vld [vmem:[#allocation5 + $0x8] sm:$0xff]
    %v63 = vld [vmem:[#allocation5 + $0x10] sm:$0xff]
    %v64 = vld [vmem:[#allocation5 + $0x18] sm:$0xff]
    %v65 = vld [vmem:[#allocation5 + $0x20] sm:$0xff]
    %v66 = vld [vmem:[#allocation5 + $0x28] sm:$0xff]
    %v67 = vld [vmem:[#allocation5 + $0x30] sm:$0xff]
    %v68 = vld [vmem:[#allocation5 + $0x38] sm:$0xff]
    %v69 = vld [vmem:[#allocation5 + $0x40] sm:$0xff]
    %v70 = vld [vmem:[#allocation5 + $0x48] sm:$0xff]
    %v71 = vld [vmem:[#allocation5 + $0x50] sm:$0xff]
    %v72 = vld [vmem:[#allocation5 + $0x58] sm:$0xff]
    %v73 = vld [vmem:[#allocation5 + $0x60] sm:$0xff]
    %v74 = vld [vmem:[#allocation5 + $0x68] sm:$0xff]
    %v75 = vld [vmem:[#allocation5 + $0x70] sm:$0xff]
    %v76 = vld [vmem:[#allocation5 + $0x78] sm:$0xff]
    %v77 = vld [vmem:[#allocation5 + $0x80] sm:$0xff]
    %v78 = vld [vmem:[#allocation5 + $0x88] sm:$0xff]
    %v79 = vld [vmem:[#allocation5 + $0x90] sm:$0xff]
    %v80 = vld [vmem:[#allocation5 + $0x98] sm:$0xff]
    %v81 = vld [vmem:[#allocation5 + $0xa0] sm:$0xff]
    %v82 = vld [vmem:[#allocation5 + $0xa8] sm:$0xff]
    %v83 = vld [vmem:[#allocation5 + $0xb0] sm:$0xff]
    %v84 = vld [vmem:[#allocation5 + $0xb8] sm:$0xff]
    %v85 = vld [vmem:[#allocation5 + $0xc0] sm:$0xff]
    %v86 = vld [vmem:[#allocation5 + $0xc8] sm:$0xff]
    %v87 = vld [vmem:[#allocation5 + $0xd0] sm:$0xff]
    %v88 = vld [vmem:[#allocation5 + $0xd8] sm:$0xff]
    %v89 = vld [vmem:[#allocation5 + $0xe0] sm:$0xff]
    %v90 = vld [vmem:[#allocation5 + $0xe8] sm:$0xff]
    %v91 = vld [vmem:[#allocation5 + $0xf0] sm:$0xff]
    %v92 = vld [vmem:[#allocation5 + $0xf8] sm:$0xff]
    %v93 = vld [vmem:[%s2] sm:$0x3]
    %v95 = vlaneseq
    %v96 = vshrl.u32 %v95, 7
    %v97 = vsub.s32 0, %v96
    %v98 = vrot.slane %v93, %v97
    %v99 = vlaneseq
    %v100 = vshrl.u32 %v99, 7
    %v101 = vsub.s32 1, %v100
    %v102 = vrot.slane %v93, %v101
    %105 = vmatprep.subr.mxu0 %v62
    %106 = vmatpush1.msra.mxu0 %v61
    %107 = vmatprep.subr.mxu0 %v64
    %108 = vmatpush1.msra.mxu0 %v63
    %109 = vmatprep.subr.mxu0 %v66
    %110 = vmatpush1.msra.mxu0 %v65
    %111 = vmatprep.subr.mxu0 %v68
    %112 = vmatpush1.msra.mxu0 %v67
    %113 = vmatprep.subr.mxu0 %v70
    %114 = vmatpush1.msra.mxu0 %v69
    %115 = vmatprep.subr.mxu0 %v72
    %116 = vmatpush1.msra.mxu0 %v71
    %117 = vmatprep.subr.mxu0 %v74
    %118 = vmatpush1.msra.mxu0 %v73
    %119 = vmatprep.subr.mxu0 %v76
    %120 = vmatpush1.msra.mxu0 %v75
    %121 = vmatprep.subr.mxu0 %v78
    %122 = vmatpush1.msra.mxu0 %v77
    %123 = vmatprep.subr.mxu0 %v80
    %124 = vmatpush1.msra.mxu0 %v79
    %125 = vmatprep.subr.mxu0 %v82
    %126 = vmatpush1.msra.mxu0 %v81
    %127 = vmatprep.subr.mxu0 %v84
    %128 = vmatpush1.msra.mxu0 %v83
    %129 = vmatprep.subr.mxu0 %v86
    %130 = vmatpush1.msra.mxu0 %v85
    %131 = vmatprep.subr.mxu0 %v88
    %132 = vmatpush1.msra.mxu0 %v87
    %133 = vmatprep.subr.mxu0 %v90
    %134 = vmatpush1.msra.mxu0 %v89
    %135 = vmatprep.subr.mxu0 %v92
    %136 = vmatpush1.msra.mxu0 %v91
    %137 = vmatprep.subr.mxu0 0.0
    %138 = vmatpush1.msra.mxu0 0.0
    %139 = vmatprep.subr.mxu0 0.0
    %140 = vmatpush1.msra.mxu0 0.0
    %141 = vmatprep.subr.mxu0 0.0
    %142 = vmatpush1.msra.mxu0 0.0
    %143 = vmatprep.subr.mxu0 0.0
    %144 = vmatpush1.msra.mxu0 0.0
    %145 = vmatprep.subr.mxu0 0.0
    %146 = vmatpush1.msra.mxu0 0.0
    %147 = vmatprep.subr.mxu0 0.0
    %148 = vmatpush1.msra.mxu0 0.0
    %149 = vmatprep.subr.mxu0 0.0
    %150 = vmatpush1.msra.mxu0 0.0
    %151 = vmatprep.subr.mxu0 0.0
    %152 = vmatpush1.msra.mxu0 0.0
    %153 = vmatprep.subr.mxu0 0.0
    %154 = vmatpush1.msra.mxu0 0.0
    %155 = vmatprep.subr.mxu0 0.0
    %156 = vmatpush1.msra.mxu0 0.0
    %157 = vmatprep.subr.mxu0 0.0
    %158 = vmatpush1.msra.mxu0 0.0
    %159 = vmatprep.subr.mxu0 0.0
    %160 = vmatpush1.msra.mxu0 0.0
    %161 = vmatprep.subr.mxu0 0.0
    %162 = vmatpush1.msra.mxu0 0.0
    %163 = vmatprep.subr.mxu0 0.0
    %164 = vmatpush1.msra.mxu0 0.0
    %165 = vmatprep.subr.mxu0 0.0
    %166 = vmatpush1.msra.mxu0 0.0
    %167 = vmatprep.subr.mxu0 0.0
    %168 = vmatpush1.msra.mxu0 0.0
    %169 = vmatprep.mubr.f32.mxu0 0.0
    %170 = vmatmul.mubr.f32.gmra.mrb[0].mxu0 %v60
    %v171 = vpop.f32.mrb[0].mxu0
    %v172 = vadd.f32 %v98, %v171
    %v173 = vpop.f32.mrb[0].mxu0
    %v174 = vadd.f32 %v102, %v173
    %175 = vdwg.mxu0
    %vm176 = vcmp.gt.f32.partialorder %v172, 0.0
    %vm177 = vcmp.gt.f32.partialorder %v174, 0.0
    %v178 = vmul.f32 %v172, 0.01
    %v179 = vmul.f32 %v174, 0.01
    %v180 = vsel %vm176, %v172, %v178
    %v181 = vsel %vm177, %v174, %v179
    %v182 = vld [vmem:[#allocation7] sm:$0xff]
    %v183 = vld [vmem:[#allocation7 + $0x8] sm:$0xff]
    %v184 = vld [vmem:[#allocation7 + $0x10] sm:$0xff]
    %v185 = vld [vmem:[#allocation7 + $0x18] sm:$0xff]
    %v186 = vld [vmem:[#allocation7 + $0x20] sm:$0xff]
    %v187 = vld [vmem:[#allocation7 + $0x28] sm:$0xff]
    %v188 = vld [vmem:[#allocation7 + $0x30] sm:$0xff]
    %v189 = vld [vmem:[#allocation7 + $0x38] sm:$0xff]
    %v190 = vld [vmem:[#allocation7 + $0x40] sm:$0xff]
    %v191 = vld [vmem:[#allocation7 + $0x48] sm:$0xff]
    %v192 = vld [vmem:[#allocation7 + $0x50] sm:$0xff]
    %v193 = vld [vmem:[#allocation7 + $0x58] sm:$0xff]
    %v194 = vld [vmem:[#allocation7 + $0x60] sm:$0xff]
    %v195 = vld [vmem:[#allocation7 + $0x68] sm:$0xff]
    %v196 = vld [vmem:[#allocation7 + $0x70] sm:$0xff]
    %v197 = vld [vmem:[#allocation7 + $0x78] sm:$0xff]
    %v198 = vld [vmem:[#allocation7 + $0x80] sm:$0xff]
    %v199 = vld [vmem:[#allocation7 + $0x88] sm:$0xff]
    %v200 = vld [vmem:[#allocation7 + $0x90] sm:$0xff]
    %v201 = vld [vmem:[#allocation7 + $0x98] sm:$0xff]
    %v202 = vld [vmem:[#allocation7 + $0xa0] sm:$0xff]
    %v203 = vld [vmem:[#allocation7 + $0xa8] sm:$0xff]
    %v204 = vld [vmem:[#allocation7 + $0xb0] sm:$0xff]
    %v205 = vld [vmem:[#allocation7 + $0xb8] sm:$0xff]
    %v206 = vld [vmem:[#allocation7 + $0xc0] sm:$0xff]
    %v207 = vld [vmem:[#allocation7 + $0xc8] sm:$0xff]
    %v208 = vld [vmem:[#allocation7 + $0xd0] sm:$0xff]
    %v209 = vld [vmem:[#allocation7 + $0xd8] sm:$0xff]
    %v210 = vld [vmem:[#allocation7 + $0xe0] sm:$0xff]
    %v211 = vld [vmem:[#allocation7 + $0xe8] sm:$0xff]
    %v212 = vld [vmem:[#allocation7 + $0xf0] sm:$0xff]
    %v213 = vld [vmem:[#allocation7 + $0xf8] sm:$0xff]
    %v214 = vld [vmem:[%s4] sm:$0x1]
    %v216 = vlaneseq
    %v217 = vshrl.u32 %v216, 7
    %v218 = vsub.s32 0, %v217
    %v219 = vrot.slane %v214, %v218
    %221 = vmatprep.subr.mxu0 0.0
    %222 = vmatpush1.msra.mxu0 %v182
    %223 = vmatprep.subr.mxu0 0.0
    %224 = vmatpush1.msra.mxu0 %v183
    %225 = vmatprep.subr.mxu0 0.0
    %226 = vmatpush1.msra.mxu0 %v184
    %227 = vmatprep.subr.mxu0 0.0
    %228 = vmatpush1.msra.mxu0 %v185
    %229 = vmatprep.subr.mxu0 0.0
    %230 = vmatpush1.msra.mxu0 %v186
    %231 = vmatprep.subr.mxu0 0.0
    %232 = vmatpush1.msra.mxu0 %v187
    %233 = vmatprep.subr.mxu0 0.0
    %234 = vmatpush1.msra.mxu0 %v188
    %235 = vmatprep.subr.mxu0 0.0
    %236 = vmatpush1.msra.mxu0 %v189
    %237 = vmatprep.subr.mxu0 0.0
    %238 = vmatpush1.msra.mxu0 %v190
    %239 = vmatprep.subr.mxu0 0.0
    %240 = vmatpush1.msra.mxu0 %v191
    %241 = vmatprep.subr.mxu0 0.0
    %242 = vmatpush1.msra.mxu0 %v192
    %243 = vmatprep.subr.mxu0 0.0
    %244 = vmatpush1.msra.mxu0 %v193
    %245 = vmatprep.subr.mxu0 0.0
    %246 = vmatpush1.msra.mxu0 %v194
    %247 = vmatprep.subr.mxu0 0.0
    %248 = vmatpush1.msra.mxu0 %v195
    %249 = vmatprep.subr.mxu0 0.0
    %250 = vmatpush1.msra.mxu0 %v196
    %251 = vmatprep.subr.mxu0 0.0
    %252 = vmatpush1.msra.mxu0 %v197
    %253 = vmatprep.subr.mxu0 0.0
    %254 = vmatpush1.msra.mxu0 %v198
    %255 = vmatprep.subr.mxu0 0.0
    %256 = vmatpush1.msra.mxu0 %v199
    %257 = vmatprep.subr.mxu0 0.0
    %258 = vmatpush1.msra.mxu0 %v200
    %259 = vmatprep.subr.mxu0 0.0
    %260 = vmatpush1.msra.mxu0 %v201
    %261 = vmatprep.subr.mxu0 0.0
    %262 = vmatpush1.msra.mxu0 %v202
    %263 = vmatprep.subr.mxu0 0.0
    %264 = vmatpush1.msra.mxu0 %v203
    %265 = vmatprep.subr.mxu0 0.0
    %266 = vmatpush1.msra.mxu0 %v204
    %267 = vmatprep.subr.mxu0 0.0
    %268 = vmatpush1.msra.mxu0 %v205
    %269 = vmatprep.subr.mxu0 0.0
    %270 = vmatpush1.msra.mxu0 %v206
    %271 = vmatprep.subr.mxu0 0.0
    %272 = vmatpush1.msra.mxu0 %v207
    %273 = vmatprep.subr.mxu0 0.0
    %274 = vmatpush1.msra.mxu0 %v208
    %275 = vmatprep.subr.mxu0 0.0
    %276 = vmatpush1.msra.mxu0 %v209
    %277 = vmatprep.subr.mxu0 0.0
    %278 = vmatpush1.msra.mxu0 %v210
    %279 = vmatprep.subr.mxu0 0.0
    %280 = vmatpush1.msra.mxu0 %v211
    %281 = vmatprep.subr.mxu0 0.0
    %282 = vmatpush1.msra.mxu0 %v212
    %283 = vmatprep.subr.mxu0 0.0
    %284 = vmatpush1.msra.mxu0 %v213
    %285 = vmatprep.mubr.f32.mxu0 %v181
    %286 = vmatmul.mubr.f32.gmra.mrb[0].mxu0 %v180
    %v287 = vpop.f32.mrb[0].mxu0
    %v288 = vadd.f32 %v219, %v287
    %v289 = vpop.f32.mrb[0].mxu0
    %290 = vdwg.mxu0
    %vm291 = vcmp.gt.f32.partialorder %v288, 0.0
    %v292 = vmul.f32 %v288, 0.01
    %v293 = vsel %vm291, %v288, %v292
    %294 = vst [vmem:[#allocation8] sm:$0xff] %v293
    // Predicated region
    $region34: #{tpu_custom_call.1} parent=1 // pred_check
      _
    $region35: #{tpu_custom_call.1} parent=1 // pred_check_branch
      %296 = sbr.rel (0) target = $region37
    $region36: #{tpu_custom_call.1} parent=1 // pred_region
      %s298 = ssub.s32 128, 128
      %299 = vsyncadd [#allocation4], %s298
      %s301 = sshll.u32 [#allocation8], 4
      %s302 = int_to_ptr.vmem [resolvable:$true] %s301
      %304 = dma.vmem_to_hbm [thread:$0]  %s302, 128, %s5, [#allocation4]
    $region37: #{tpu_custom_call.1} parent=1 // pred_fallthru
      _
    // Predicated region
    $region38: #{tpu_custom_call.1} parent=1 // pred_check
      _
    $region39: #{tpu_custom_call.1} parent=1 // pred_check_branch
      %306 = sbr.rel (0) target = $region41
    $region40: #{tpu_custom_call.1} parent=1 // pred_region
      %307 = dma.done [#allocation4], 128
    $region41: #{tpu_custom_call.1} parent=1 // pred_fallthru
      _
    %308 = vsyncpa [#allocation3], 1
    %309 = vsyncpa [#allocation6], 1
    %310 = vsyncpa [#allocation4], 1

</llo_original>
